<compile_context>
chip_gen: v5e
topology: v5e:2x2
jax: 0.10.0
libtpu: 0.0.40
codegen_flags: <defaults>
</compile_context>

<pallas_src>
import functools

import jax
import jax.numpy as jnp
from jax.experimental import pallas as pl
from jax.experimental.pallas import tpu as pltpu

S_HID = 256           # fcs1 output width
H_HID = 128           # fcs2 / fca1 / fc2 output width
DEFAULT_TILE_N = 4096  # row-tile cap; ~20 MiB worst-case VMEM, inside 32 MiB


def _round_up(x, m):
    return (x + m - 1) // m * m


def _choose_tile(n, tile_cap):
    """Rows per grid step.

    Multiple of 128 (keeps the lane-dense output full width), close to an
    even split of n (minimal tail waste), at least 2 steps for big batches so
    both v7x TensorCores get work, capped so VMEM stays well inside the
    scoped limit on all generations (v7x has only 64 MiB physical).
    """
    n = int(n)
    cap = max(128, (int(tile_cap) // 128) * 128)
    if n <= 128:
        return 128
    min_steps = 2 if n >= 512 else 1
    steps = max(min_steps, pl.cdiv(n, cap))
    return _round_up(pl.cdiv(n, steps), 128)


# ----------------------------------------------------------------------------
# Kernel
# ----------------------------------------------------------------------------
def critic_kernel(state_ref, action_ref,
                  w_s1_ref, b_s1_ref,
                  w_a1_ref, b_a1_ref,
                  w_s2_ref, b_s2_ref,
                  w_fc2_ref, b_fc2_ref,
                  w_fc3_ref, b_fc3_ref,
                  out_ref):
    f32 = jnp.float32
    bf16 = jnp.bfloat16

    # bf16 casts happen in-kernel (VPU) so the wrapper never touches the batch.
    s_in = state_ref[...].astype(bf16)      # [tile, state_dim]
    a_in = action_ref[...].astype(bf16)     # [tile, action_dim]

    # fcs1: state -> 256
    s1 = jnp.maximum(
        jnp.dot(s_in, w_s1_ref[...], preferred_element_type=f32)
        + b_s1_ref[...], 0.0)
    # fca1: action -> 128
    a1 = jnp.maximum(
        jnp.dot(a_in, w_a1_ref[...], preferred_element_type=f32)
        + b_a1_ref[...], 0.0)
    # fcs2: 256 -> 128
    s2 = jnp.maximum(
        jnp.dot(s1.astype(bf16), w_s2_ref[...], preferred_element_type=f32)
        + b_s2_ref[...], 0.0)

    # fc2 on cat(s2, a1): a single K=256 MXU pass (lane concat at a 128
    # boundary; fills the 256-deep systolic array on v6e/v7x).
    cat = jnp.concatenate([s2.astype(bf16), a1.astype(bf16)], axis=-1)
    x = jnp.maximum(
        jnp.dot(cat, w_fc2_ref[...], preferred_element_type=f32)
        + b_fc2_ref[...], 0.0)

    # fc3 head: q[r] = sum_d x[r, d] * w[d] + b, produced LANE-dense.
    # w_fc3 is pre-padded to [8, 128] (row 0 live); contracting both minor
    # dims (A @ B^T, same pattern as attention scores) puts the batch rows on
    # the lane axis of the result -> unmasked full-width output stores.
    qs = jax.lax.dot_general(
        w_fc3_ref[...], x.astype(bf16),
        dimension_numbers=(((1,), (1,)), ((), ())),
        preferred_element_type=f32)          # [8, tile]; row 0 is q
    out_ref[0] = qs[0:1] + b_fc3_ref[...]    # out block (1, 1, tile)


# ----------------------------------------------------------------------------
# Parameter construction (mirrors the PyTorch init quirks exactly)
# ----------------------------------------------------------------------------
def fanin_init(key, size, fanin=None):
    """JAX port of the PyTorch fanin_init: U(-1/sqrt(fanin), 1/sqrt(fanin)).

    The original passes the PyTorch weight shape (out, in) and defaults fanin
    to size[0] (= out_features); reproduced exactly.
    """
    fanin = fanin or size[0]
    v = 1.0 / jnp.sqrt(jnp.asarray(fanin, jnp.float32))
    return jax.random.uniform(key, size, jnp.float32, minval=-v, maxval=v)


def default_bias_init(key, out_features, in_features):
    # PyTorch nn.Linear default bias init: U(-1/sqrt(in), 1/sqrt(in))
    v = 1.0 / jnp.sqrt(jnp.asarray(in_features, jnp.float32))
    return jax.random.uniform(key, (out_features,), jnp.float32,
                              minval=-v, maxval=v)


def make_critic_params(key, state_dim, action_dim):
    ks = jax.random.split(key, 10)
    # weights stored in PyTorch layout [out, in]
    return dict(
        w_fcs1=fanin_init(ks[0], (S_HID, state_dim)),
        b_fcs1=default_bias_init(ks[1], S_HID, state_dim),
        w_fcs2=fanin_init(ks[2], (H_HID, S_HID)),
        b_fcs2=default_bias_init(ks[3], H_HID, S_HID),
        w_fca1=fanin_init(ks[4], (H_HID, action_dim)),
        b_fca1=default_bias_init(ks[5], H_HID, action_dim),
        w_fc2=fanin_init(ks[6], (H_HID, 2 * H_HID)),
        b_fc2=default_bias_init(ks[7], H_HID, 2 * H_HID),
        w_fc3=fanin_init(ks[8], (1, H_HID)),
        b_fc3=default_bias_init(ks[9], 1, H_HID),
    )


def prepare_critic_weights(params):
    """One-time preprocessing (hoisted out of the per-call hot path):
    transpose to [in, out], cast MXU operands to bf16, reshape biases to
    broadcastable rows, pad w_fc3 to an 8-sublane block for the MXU head."""
    f32 = jnp.float32
    bf16 = jnp.bfloat16
    w_fc3_pad = jnp.zeros((8, H_HID), f32).at[0:1].set(
        params["w_fc3"].reshape(1, H_HID))
    return dict(
        w_s1=params["w_fcs1"].T.astype(bf16),               # [state_dim, 256]
        b_s1=params["b_fcs1"].reshape(1, -1).astype(f32),
        w_a1=params["w_fca1"].T.astype(bf16),               # [action_dim, 128]
        b_a1=params["b_fca1"].reshape(1, -1).astype(f32),
        w_s2=params["w_fcs2"].T.astype(bf16),                # [256, 128]
        b_s2=params["b_fcs2"].reshape(1, -1).astype(f32),
        w_fc2=params["w_fc2"].T.astype(bf16),                # [256, 128]
        b_fc2=params["b_fc2"].reshape(1, -1).astype(f32),
        w_fc3=w_fc3_pad.astype(bf16),                        # [8, 128], row 0
        b_fc3=params["b_fc3"].reshape(1, 1).astype(f32),
    )


# ----------------------------------------------------------------------------
# Forward (hot path)
# ----------------------------------------------------------------------------
@functools.partial(jax.jit, static_argnames=("tile_n",))
def critic_forward(prepped, state, action, *, tile_n=DEFAULT_TILE_N):
    n, state_dim = state.shape
    action_dim = action.shape[1]

    tile = _choose_tile(n, tile_n)
    num_steps = pl.cdiv(n, tile)

    def resident(arr):
        return pl.BlockSpec(arr.shape, lambda i: (0,) * arr.ndim)

    out = pl.pallas_call(
        critic_kernel,
        # Lane-dense output: (steps, 1, tile) f32, block (1, 1, tile).
        out_shape=jax.ShapeDtypeStruct((num_steps, 1, tile), jnp.float32),
        grid=(num_steps,),
        in_specs=[
            pl.BlockSpec((tile, state_dim), lambda i: (i, 0)),
            pl.BlockSpec((tile, action_dim), lambda i: (i, 0)),
            resident(prepped["w_s1"]), resident(prepped["b_s1"]),
            resident(prepped["w_a1"]), resident(prepped["b_a1"]),
            resident(prepped["w_s2"]), resident(prepped["b_s2"]),
            resident(prepped["w_fc2"]), resident(prepped["b_fc2"]),
            resident(prepped["w_fc3"]), resident(prepped["b_fc3"]),
        ],
        out_specs=pl.BlockSpec((1, 1, tile), lambda i: (i, 0, 0)),
        compiler_params=pltpu.CompilerParams(
            dimension_semantics=("parallel",),
            vmem_limit_bytes=32 * 1024 * 1024,
        ),
    )(state, action,
      prepped["w_s1"], prepped["b_s1"],
      prepped["w_a1"], prepped["b_a1"],
      prepped["w_s2"], prepped["b_s2"],
      prepped["w_fc2"], prepped["b_fc2"],
      prepped["w_fc3"], prepped["b_fc3"])

    # (steps, 1, tile) -> (steps*tile, 1); rows >= n are clipped-boundary
    # garbage and are sliced off here.
    return out.reshape(num_steps * tile, 1)[:n]


# ----------------------------------------------------------------------------
# References
# ----------------------------------------------------------------------------
def critic_forward_ref(params, state, action):
    """Pure-JAX f32 reference of the PyTorch forward pass."""
    f32 = jnp.float32
    state = state.astype(f32)
    action = action.astype(f32)
    s1 = jax.nn.relu(state @ params["w_fcs1"].T + params["b_fcs1"])
    s2 = jax.nn.relu(s1 @ params["w_fcs2"].T + params["b_fcs2"])
    a1 = jax.nn.relu(action @ params["w_fca1"].T + params["b_fca1"])
    x = jnp.concatenate((s2, a1), axis=1)
    x = jax.nn.relu(x @ params["w_fc2"].T + params["b_fc2"])
    return x @ params["w_fc3"].T + params["b_fc3"]


def critic_forward_bf16_ref(params, state, action):
    """Reference mirroring the kernel's bf16-input / f32-accumulation math."""
    f32 = jnp.float32
    bf16 = jnp.bfloat16

    def mm(x, w):
        return jnp.dot(x.astype(bf16), w.astype(bf16),
                       preferred_element_type=f32)

    s1 = jax.nn.relu(mm(state, params["w_fcs1"].T) + params["b_fcs1"])
    a1 = jax.nn.relu(mm(action, params["w_fca1"].T) + params["b_fca1"])
    s2 = jax.nn.relu(mm(s1, params["w_fcs2"].T) + params["b_fcs2"])
    x = jax.nn.relu(mm(jnp.concatenate([s2, a1], axis=1), params["w_fc2"].T)
                    + params["b_fc2"])
    return mm(x, params["w_fc3"].T) + params["b_fc3"]


# ----------------------------------------------------------------------------
if __name__ == "__main__":
    key = jax.random.PRNGKey(0)
    k_params, k_state, k_action, k_state2, k_action2 = jax.random.split(key, 5)

    n, state_dim, action_dim = 8, 16, 4
    params = make_critic_params(k_params, state_dim, action_dim)
    prepped = prepare_critic_weights(params)

    state = jax.random.normal(k_state, (n, state_dim), jnp.float32)
    action = jax.random.normal(k_action, (n, action_dim), jnp.float32)

    q = jax.block_until_ready(critic_forward(prepped, state, action))
    assert q.shape == (n, 1)

    q_bf16 = critic_forward_bf16_ref(params, state, action)
    q_f32 = critic_forward_ref(params, state, action)
    assert jnp.allclose(q, q_bf16, atol=5e-3, rtol=5e-3), (
        f"bf16-ref max abs err {jnp.max(jnp.abs(q - q_bf16))}")
    assert jnp.allclose(q, q_f32, atol=5e-2, rtol=5e-2), (
        f"f32-ref max abs err {jnp.max(jnp.abs(q - q_f32))}")

    # Larger, non-tile-multiple batch: exercises the multi-step grid, the
    # clipped boundary block, and the lane-dense output reshape path.
    n2 = 2500
    state2 = jax.random.normal(k_state2, (n2, state_dim), jnp.float32)
    action2 = jax.random.normal(k_action2, (n2, action_dim), jnp.float32)
    q2 = jax.block_until_ready(critic_forward(prepped, state2, action2))
    assert q2.shape == (n2, 1)
    q2_bf16 = critic_forward_bf16_ref(params, state2, action2)
    assert jnp.allclose(q2, q2_bf16, atol=5e-3, rtol=5e-3), (
        f"bf16-ref (large batch) max abs err {jnp.max(jnp.abs(q2 - q2_bf16))}")

    print("KERNEL_OK")
</pallas_src>

<mosaic_0001>
module attributes {stable_mosaic.version = 11 : i64} {
  func.func @critic_kernel(%arg0: i32, %arg1: memref<128x16xf32, #tpu.memory_space<vmem>>, %arg2: memref<128x4xf32, #tpu.memory_space<vmem>>, %arg3: memref<16x256xbf16, #tpu.memory_space<vmem>>, %arg4: memref<1x256xf32, #tpu.memory_space<vmem>>, %arg5: memref<4x128xbf16, #tpu.memory_space<vmem>>, %arg6: memref<1x128xf32, #tpu.memory_space<vmem>>, %arg7: memref<256x128xbf16, #tpu.memory_space<vmem>>, %arg8: memref<1x128xf32, #tpu.memory_space<vmem>>, %arg9: memref<256x128xbf16, #tpu.memory_space<vmem>>, %arg10: memref<1x128xf32, #tpu.memory_space<vmem>>, %arg11: memref<8x128xbf16, #tpu.memory_space<vmem>>, %arg12: memref<1x1xf32, #tpu.memory_space<vmem>>, %arg13: memref<1x1x128xf32, #tpu.memory_space<vmem>>) attributes {dimension_semantics = [#tpu.dimension_semantics<parallel>], iteration_bounds = array<i64: 1>, scalar_prefetch = 0 : i64, scratch_operands = 0 : i64, tpu.core_type = #tpu.core_type<tc>, window_params = [{transform_indices = @transform_0, window_bounds = array<i64: 128, 16>}, {transform_indices = @transform_1, window_bounds = array<i64: 128, 4>}, {pipeline_mode = #tpu.pipeline_mode<synchronous>, transform_indices = @transform_2, window_bounds = array<i64: 16, 256>}, {pipeline_mode = #tpu.pipeline_mode<synchronous>, transform_indices = @transform_3, window_bounds = array<i64: 1, 256>}, {pipeline_mode = #tpu.pipeline_mode<synchronous>, transform_indices = @transform_4, window_bounds = array<i64: 4, 128>}, {pipeline_mode = #tpu.pipeline_mode<synchronous>, transform_indices = @transform_5, window_bounds = array<i64: 1, 128>}, {pipeline_mode = #tpu.pipeline_mode<synchronous>, transform_indices = @transform_6, window_bounds = array<i64: 256, 128>}, {pipeline_mode = #tpu.pipeline_mode<synchronous>, transform_indices = @transform_7, window_bounds = array<i64: 1, 128>}, {pipeline_mode = #tpu.pipeline_mode<synchronous>, transform_indices = @transform_8, window_bounds = array<i64: 256, 128>}, {pipeline_mode = #tpu.pipeline_mode<synchronous>, transform_indices = @transform_9, window_bounds = array<i64: 1, 128>}, {pipeline_mode = #tpu.pipeline_mode<synchronous>, transform_indices = @transform_10, window_bounds = array<i64: 8, 128>}, {pipeline_mode = #tpu.pipeline_mode<synchronous>, transform_indices = @transform_11, window_bounds = array<i64: 1, 1>}, {transform_indices = @transform_12, window_bounds = array<i64: 1, 1, 128>}]} {
    %c0 = arith.constant 0 : index
    %c0_0 = arith.constant 0 : index
    %0 = vector.load %arg1[%c0, %c0_0] : memref<128x16xf32, #tpu.memory_space<vmem>>, vector<128x16xf32>
    %1 = arith.truncf %0 : vector<128x16xf32> to vector<128x16xbf16>
    %c0_1 = arith.constant 0 : index
    %c0_2 = arith.constant 0 : index
    %2 = vector.load %arg2[%c0_1, %c0_2] : memref<128x4xf32, #tpu.memory_space<vmem>>, vector<128x4xf32>
    %3 = arith.truncf %2 : vector<128x4xf32> to vector<128x4xbf16>
    %c0_3 = arith.constant 0 : index
    %c0_4 = arith.constant 0 : index
    %4 = vector.load %arg3[%c0_3, %c0_4] : memref<16x256xbf16, #tpu.memory_space<vmem>>, vector<16x256xbf16>
    %cst = arith.constant dense<0.000000e+00> : vector<128x256xf32>
    %5 = tpu.matmul %1, %4, %cst {dimension_numbers = #tpu.dot_dimension_numbers<[1], [0], [0], [1], [0, 0, 1, 1], [], []>} : vector<128x16xbf16>, vector<16x256xbf16>, vector<128x256xf32> -> vector<128x256xf32>
    %c0_5 = arith.constant 0 : index
    %c0_6 = arith.constant 0 : index
    %6 = vector.load %arg4[%c0_5, %c0_6] : memref<1x256xf32, #tpu.memory_space<vmem>>, vector<1x256xf32>
    %7 = vector.broadcast %6 : vector<1x256xf32> to vector<128x256xf32>
    %8 = arith.addf %5, %7 : vector<128x256xf32>
    %cst_7 = arith.constant 0.000000e+00 : f32
    %9 = vector.broadcast %cst_7 : f32 to vector<128x256xf32>
    %10 = arith.maximumf %8, %9 : vector<128x256xf32>
    %c0_8 = arith.constant 0 : index
    %c0_9 = arith.constant 0 : index
    %11 = vector.load %arg5[%c0_8, %c0_9] : memref<4x128xbf16, #tpu.memory_space<vmem>>, vector<4x128xbf16>
    %cst_10 = arith.constant dense<0.000000e+00> : vector<128x128xf32>
    %12 = tpu.matmul %3, %11, %cst_10 {dimension_numbers = #tpu.dot_dimension_numbers<[1], [0], [0], [1], [0, 0, 1, 1], [], []>} : vector<128x4xbf16>, vector<4x128xbf16>, vector<128x128xf32> -> vector<128x128xf32>
    %c0_11 = arith.constant 0 : index
    %c0_12 = arith.constant 0 : index
    %13 = vector.load %arg6[%c0_11, %c0_12] : memref<1x128xf32, #tpu.memory_space<vmem>>, vector<1x128xf32>
    %14 = vector.broadcast %13 : vector<1x128xf32> to vector<128x128xf32>
    %15 = arith.addf %12, %14 : vector<128x128xf32>
    %cst_13 = arith.constant 0.000000e+00 : f32
    %16 = vector.broadcast %cst_13 : f32 to vector<128x128xf32>
    %17 = arith.maximumf %15, %16 : vector<128x128xf32>
    %18 = arith.truncf %10 : vector<128x256xf32> to vector<128x256xbf16>
    %c0_14 = arith.constant 0 : index
    %c0_15 = arith.constant 0 : index
    %19 = vector.load %arg7[%c0_14, %c0_15] : memref<256x128xbf16, #tpu.memory_space<vmem>>, vector<256x128xbf16>
    %cst_16 = arith.constant dense<0.000000e+00> : vector<128x128xf32>
    %20 = tpu.matmul %18, %19, %cst_16 {dimension_numbers = #tpu.dot_dimension_numbers<[1], [0], [0], [1], [0, 0, 1, 1], [], []>} : vector<128x256xbf16>, vector<256x128xbf16>, vector<128x128xf32> -> vector<128x128xf32>
    %c0_17 = arith.constant 0 : index
    %c0_18 = arith.constant 0 : index
    %21 = vector.load %arg8[%c0_17, %c0_18] : memref<1x128xf32, #tpu.memory_space<vmem>>, vector<1x128xf32>
    %22 = vector.broadcast %21 : vector<1x128xf32> to vector<128x128xf32>
    %23 = arith.addf %20, %22 : vector<128x128xf32>
    %cst_19 = arith.constant 0.000000e+00 : f32
    %24 = vector.broadcast %cst_19 : f32 to vector<128x128xf32>
    %25 = arith.maximumf %23, %24 : vector<128x128xf32>
    %26 = arith.truncf %25 : vector<128x128xf32> to vector<128x128xbf16>
    %27 = arith.truncf %17 : vector<128x128xf32> to vector<128x128xbf16>
    %28 = tpu.concatenate %26, %27 in 1 : vector<128x128xbf16>, vector<128x128xbf16> -> vector<128x256xbf16>
    %c0_20 = arith.constant 0 : index
    %c0_21 = arith.constant 0 : index
    %29 = vector.load %arg9[%c0_20, %c0_21] : memref<256x128xbf16, #tpu.memory_space<vmem>>, vector<256x128xbf16>
    %cst_22 = arith.constant dense<0.000000e+00> : vector<128x128xf32>
    %30 = tpu.matmul %28, %29, %cst_22 {dimension_numbers = #tpu.dot_dimension_numbers<[1], [0], [0], [1], [0, 0, 1, 1], [], []>} : vector<128x256xbf16>, vector<256x128xbf16>, vector<128x128xf32> -> vector<128x128xf32>
    %c0_23 = arith.constant 0 : index
    %c0_24 = arith.constant 0 : index
    %31 = vector.load %arg10[%c0_23, %c0_24] : memref<1x128xf32, #tpu.memory_space<vmem>>, vector<1x128xf32>
    %32 = vector.broadcast %31 : vector<1x128xf32> to vector<128x128xf32>
    %33 = arith.addf %30, %32 : vector<128x128xf32>
    %cst_25 = arith.constant 0.000000e+00 : f32
    %34 = vector.broadcast %cst_25 : f32 to vector<128x128xf32>
    %35 = arith.maximumf %33, %34 : vector<128x128xf32>
    %c0_26 = arith.constant 0 : index
    %c0_27 = arith.constant 0 : index
    %36 = vector.load %arg11[%c0_26, %c0_27] : memref<8x128xbf16, #tpu.memory_space<vmem>>, vector<8x128xbf16>
    %37 = arith.truncf %35 : vector<128x128xf32> to vector<128x128xbf16>
    %cst_28 = arith.constant dense<0.000000e+00> : vector<8x128xf32>
    %38 = tpu.matmul %36, %37, %cst_28 {dimension_numbers = #tpu.dot_dimension_numbers<[1], [1], [0], [0], [0, 0, 1, 0], [], []>} : vector<8x128xbf16>, vector<128x128xbf16>, vector<8x128xf32> -> vector<8x128xf32>
    %39 = vector.extract_strided_slice %38 {offsets = [0, 0], sizes = [1, 128], strides = [1, 1]} : vector<8x128xf32> to vector<1x128xf32>
    %c0_29 = arith.constant 0 : index
    %c0_30 = arith.constant 0 : index
    %40 = vector.load %arg12[%c0_29, %c0_30] : memref<1x1xf32, #tpu.memory_space<vmem>>, vector<1x1xf32>
    %41 = vector.broadcast %40 : vector<1x1xf32> to vector<1x128xf32>
    %42 = arith.addf %39, %41 : vector<1x128xf32>
    %c0_31 = arith.constant 0 : index
    %c0_32 = arith.constant 0 : index
    %c0_33 = arith.constant 0 : index
    %43 = vector.load %arg13[%c0_31, %c0_32, %c0_33] : memref<1x1x128xf32, #tpu.memory_space<vmem>>, vector<1x1x128xf32>
    %44 = vector.shape_cast %43 : vector<1x1x128xf32> to vector<1x128xf32>
    %45 = vector.shape_cast %42 : vector<1x128xf32> to vector<1x1x128xf32>
    tpu.vector_store %arg13[%c0_31, %c0_32, %c0_33], %45 {strides = array<i32>} : memref<1x1x128xf32, #tpu.memory_space<vmem>>, vector<1x1x128xf32>,
    return
  }
  func.func @transform_0(%arg0: i32) -> (i32, i32) {
    %c0_i32 = arith.constant 0 : i32
    %c0_i32_0 = arith.constant 0 : i32
    return %arg0, %c0_i32 : i32, i32
  }
  func.func @transform_1(%arg0: i32) -> (i32, i32) {
    %c0_i32 = arith.constant 0 : i32
    %c0_i32_0 = arith.constant 0 : i32
    return %arg0, %c0_i32 : i32, i32
  }
  func.func @transform_2(%arg0: i32) -> (i32, i32) {
    %c0_i32 = arith.constant 0 : i32
    %c0_i32_0 = arith.constant 0 : i32
    %c0_i32_1 = arith.constant 0 : i32
    return %c0_i32, %c0_i32_0 : i32, i32
  }
  func.func @transform_3(%arg0: i32) -> (i32, i32) {
    %c0_i32 = arith.constant 0 : i32
    %c0_i32_0 = arith.constant 0 : i32
    %c0_i32_1 = arith.constant 0 : i32
    return %c0_i32, %c0_i32_0 : i32, i32
  }
  func.func @transform_4(%arg0: i32) -> (i32, i32) {
    %c0_i32 = arith.constant 0 : i32
    %c0_i32_0 = arith.constant 0 : i32
    %c0_i32_1 = arith.constant 0 : i32
    return %c0_i32, %c0_i32_0 : i32, i32
  }
  func.func @transform_5(%arg0: i32) -> (i32, i32) {
    %c0_i32 = arith.constant 0 : i32
    %c0_i32_0 = arith.constant 0 : i32
    %c0_i32_1 = arith.constant 0 : i32
    return %c0_i32, %c0_i32_0 : i32, i32
  }
  func.func @transform_6(%arg0: i32) -> (i32, i32) {
    %c0_i32 = arith.constant 0 : i32
    %c0_i32_0 = arith.constant 0 : i32
    %c0_i32_1 = arith.constant 0 : i32
    return %c0_i32, %c0_i32_0 : i32, i32
  }
  func.func @transform_7(%arg0: i32) -> (i32, i32) {
    %c0_i32 = arith.constant 0 : i32
    %c0_i32_0 = arith.constant 0 : i32
    %c0_i32_1 = arith.constant 0 : i32
    return %c0_i32, %c0_i32_0 : i32, i32
  }
  func.func @transform_8(%arg0: i32) -> (i32, i32) {
    %c0_i32 = arith.constant 0 : i32
    %c0_i32_0 = arith.constant 0 : i32
    %c0_i32_1 = arith.constant 0 : i32
    return %c0_i32, %c0_i32_0 : i32, i32
  }
  func.func @transform_9(%arg0: i32) -> (i32, i32) {
    %c0_i32 = arith.constant 0 : i32
    %c0_i32_0 = arith.constant 0 : i32
    %c0_i32_1 = arith.constant 0 : i32
    return %c0_i32, %c0_i32_0 : i32, i32
  }
  func.func @transform_10(%arg0: i32) -> (i32, i32) {
    %c0_i32 = arith.constant 0 : i32
    %c0_i32_0 = arith.constant 0 : i32
    %c0_i32_1 = arith.constant 0 : i32
    return %c0_i32, %c0_i32_0 : i32, i32
  }
  func.func @transform_11(%arg0: i32) -> (i32, i32) {
    %c0_i32 = arith.constant 0 : i32
    %c0_i32_0 = arith.constant 0 : i32
    %c0_i32_1 = arith.constant 0 : i32
    return %c0_i32, %c0_i32_0 : i32, i32
  }
  func.func @transform_12(%arg0: i32) -> (i32, i32, i32) {
    %c0_i32 = arith.constant 0 : i32
    %c0_i32_0 = arith.constant 0 : i32
    %c0_i32_1 = arith.constant 0 : i32
    return %arg0, %c0_i32, %c0_i32_0 : i32, i32, i32
  }
}

</mosaic_0001>

<llo_original>
// kernel: critic_forward.1
$region0: #{critic_forward.1}
  #allocation0 [shape = 'u32[]', space=smem, size = 0x4, offset = 0x4, fixed_abs, tag = 'smem constant byte address 0x4 - core index']
  #allocation1 [shape = 'u32[72,128]{1,0:T(1,128)}', space=vmem, size = 0x9000, scoped, tag = 'internal scratch']
  #allocation2 [shape = 'f32[1,1]{1,0:T(1,128)S(1)}', space=vmem, size = 0x200, scoped, tag = 'scoped memory for critic_forward.1']
  %s0 = inlined_call_operand.vmem [shape: f32[8,16], index: 0, kind: input, shape index: {}]
  %s1 = inlined_call_operand.vmem [shape: f32[8,4], index: 1, kind: input, shape index: {}]
  %s2 = inlined_call_operand.hbm [shape: bf16[16,256], index: 2, kind: input, shape index: {}]
  %s3 = inlined_call_operand.vmem [shape: f32[1,256], index: 3, kind: input, shape index: {}]
  %s4 = inlined_call_operand.hbm [shape: bf16[4,128], index: 4, kind: input, shape index: {}]
  %s5 = inlined_call_operand.vmem [shape: f32[1,128], index: 5, kind: input, shape index: {}]
  %s6 = inlined_call_operand.hbm [shape: bf16[256,128], index: 6, kind: input, shape index: {}]
  %s7 = inlined_call_operand.hbm [shape: f32[1,128], index: 7, kind: input, shape index: {}]
  %s8 = inlined_call_operand.hbm [shape: bf16[256,128], index: 8, kind: input, shape index: {}]
  %s9 = inlined_call_operand.hbm [shape: f32[1,128], index: 9, kind: input, shape index: {}]
  %s10 = inlined_call_operand.vmem [shape: bf16[8,128], index: 10, kind: input, shape index: {}]
  %s11 = inlined_call_operand.<no memory space> [shape: f32[1,1], index: 11, kind: input, shape index: {}]
  %s12 = inlined_call_operand.vmem [shape: f32[1,1,128], index: 12, kind: output, shape index: {}]
  %s13 = sld [smem:[#allocation0]]
  $region82: #{critic_forward.1} parent=0
    _
  %s15 = ssub.s32 1, %s13
  %s16 = scalar_select 0, %s15, %s13
  %v17 = vstv %s11
  %18 = vst [vmem:[#allocation2] sm:$0x1] %v17
  $region1: #{critic_forward.1} parent=0
    #allocation3 [shape = 'u8[8192]{0}', space=vmem, size = 0x2000, scoped, tag = 'input window, operand 2, single buffered']
    #allocation4 [shape = 's32[1]{0}', space=sflag, size = 0x4, scoped, tag = 'scoped memory for critic_forward.1']
    #allocation5 [shape = 'u8[1024]{0}', space=vmem, size = 0x400, scoped, tag = 'input window, operand 4, single buffered']
    #allocation6 [shape = 's32[1]{0}', space=sflag, size = 0x4, scoped, tag = 'scoped memory for critic_forward.1']
    #allocation7 [shape = 'u8[65536]{0}', space=vmem, size = 0x10000, scoped, tag = 'input window, operand 6, single buffered']
    #allocation8 [shape = 'u8[512]{0}', space=vmem, size = 0x400, scoped, tag = 'input window, operand 7, single buffered']
    #allocation9 [shape = 's32[1]{0}', space=sflag, size = 0x4, scoped, tag = 'scoped memory for critic_forward.1']
    #allocation10 [shape = 'u8[65536]{0}', space=vmem, size = 0x10000, scoped, tag = 'input window, operand 8, single buffered']
    #allocation11 [shape = 'u8[512]{0}', space=vmem, size = 0x400, scoped, tag = 'input window, operand 9, single buffered']
    #allocation12 [shape = 's32[1]{0}', space=sflag, size = 0x4, scoped, tag = 'scoped memory for critic_forward.1']
    %19 = vsyncpa [#allocation4], 0
    %20 = vsyncpa [#allocation6], 0
    %21 = vsyncpa [#allocation9], 0
    %22 = vsyncpa [#allocation12], 0
    // Predicated region
    $region2: #{critic_forward.1} parent=1 // pred_check
      _
    $region3: #{critic_forward.1} parent=1 // pred_check_branch
      %24 = sbr.rel (0) target = $region5
    $region4: #{critic_forward.1} parent=1 // pred_region
      _
    $region5: #{critic_forward.1} parent=1 // pred_fallthru
      _
    // Predicated region
    $region6: #{critic_forward.1} parent=1 // pred_check
      _
    $region7: #{critic_forward.1} parent=1 // pred_check_branch
      %26 = sbr.rel (0) target = $region9
    $region8: #{critic_forward.1} parent=1 // pred_region
      _
    $region9: #{critic_forward.1} parent=1 // pred_fallthru
      _
    // Predicated region
    $region10: #{critic_forward.1} parent=1 // pred_check
      _
    $region11: #{critic_forward.1} parent=1 // pred_check_branch
      %28 = sbr.rel (0) target = $region13
    $region12: #{critic_forward.1} parent=1 // pred_region
      %30 = vsyncadd [#allocation4], 0
      %s31 = sshll.u32 %s2, 4
      %s32 = int_to_ptr.hbm [resolvable:$true] %s31
      %s33 = sshll.u32 [#allocation3], 4
      %s34 = int_to_ptr.vmem [resolvable:$true] %s33
      %39 = dma.hbm_to_vmem [thread:$0]  %s32, 256, %s34, [#allocation4], 128, 128, 8
    $region13: #{critic_forward.1} parent=1 // pred_fallthru
      _
    // Predicated region
    $region14: #{critic_forward.1} parent=1 // pred_check
      _
    $region15: #{critic_forward.1} parent=1 // pred_check_branch
      %41 = sbr.rel (0) target = $region17
    $region16: #{critic_forward.1} parent=1 // pred_region
      _
    $region17: #{critic_forward.1} parent=1 // pred_fallthru
      _
    // Predicated region
    $region18: #{critic_forward.1} parent=1 // pred_check
      _
    $region19: #{critic_forward.1} parent=1 // pred_check_branch
      %43 = sbr.rel (0) target = $region21
    $region20: #{critic_forward.1} parent=1 // pred_region
      %45 = vsyncadd [#allocation6], 0
      %s47 = sshll.u32 %s4, 4
      %s48 = int_to_ptr.hbm [resolvable:$true] %s47
      %s49 = sshll.u32 [#allocation5], 4
      %s50 = int_to_ptr.vmem [resolvable:$true] %s49
      %52 = dma.hbm_to_vmem [thread:$0]  %s48, 32, %s50, [#allocation6]
    $region21: #{critic_forward.1} parent=1 // pred_fallthru
      _
    // Predicated region
    $region22: #{critic_forward.1} parent=1 // pred_check
      _
    $region23: #{critic_forward.1} parent=1 // pred_check_branch
      %54 = sbr.rel (0) target = $region25
    $region24: #{critic_forward.1} parent=1 // pred_region
      _
    $region25: #{critic_forward.1} parent=1 // pred_fallthru
      _
    // Predicated region
    $region26: #{critic_forward.1} parent=1 // pred_check
      _
    $region27: #{critic_forward.1} parent=1 // pred_check_branch
      %56 = sbr.rel (0) target = $region29
    $region28: #{critic_forward.1} parent=1 // pred_region
      %58 = vsyncadd [#allocation6], 0
      %s59 = sshll.u32 %s6, 4
      %s60 = int_to_ptr.hbm [resolvable:$true] %s59
      %s61 = sshll.u32 [#allocation7], 4
      %s62 = int_to_ptr.vmem [resolvable:$true] %s61
      %67 = dma.hbm_to_vmem [thread:$0]  %s60, 2048, %s62, [#allocation6], 64, 64, 4
    $region29: #{critic_forward.1} parent=1 // pred_fallthru
      _
    // Predicated region
    $region30: #{critic_forward.1} parent=1 // pred_check
      _
    $region31: #{critic_forward.1} parent=1 // pred_check_branch
      %69 = sbr.rel (0) target = $region33
    $region32: #{critic_forward.1} parent=1 // pred_region
      %71 = vsyncadd [#allocation9], 0
      %s73 = sshll.u32 %s7, 4
      %s74 = int_to_ptr.hbm [resolvable:$true] %s73
      %s75 = sshll.u32 [#allocation8], 4
      %s76 = int_to_ptr.vmem [resolvable:$true] %s75
      %78 = dma.hbm_to_vmem [thread:$0]  %s74, 16, %s76, [#allocation9]
    $region33: #{critic_forward.1} parent=1 // pred_fallthru
      _
    // Predicated region
    $region34: #{critic_forward.1} parent=1 // pred_check
      _
    $region35: #{critic_forward.1} parent=1 // pred_check_branch
      %80 = sbr.rel (0) target = $region37
    $region36: #{critic_forward.1} parent=1 // pred_region
      %82 = vsyncadd [#allocation9], 0
      %s83 = sshll.u32 %s8, 4
      %s84 = int_to_ptr.hbm [resolvable:$true] %s83
      %s85 = sshll.u32 [#allocation10], 4
      %s86 = int_to_ptr.vmem [resolvable:$true] %s85
      %91 = dma.hbm_to_vmem [thread:$0]  %s84, 2048, %s86, [#allocation9], 64, 64, 4
    $region37: #{critic_forward.1} parent=1 // pred_fallthru
      _
    // Predicated region
    $region38: #{critic_forward.1} parent=1 // pred_check
      _
    $region39: #{critic_forward.1} parent=1 // pred_check_branch
      %93 = sbr.rel (0) target = $region41
    $region40: #{critic_forward.1} parent=1 // pred_region
      %95 = vsyncadd [#allocation12], 0
      %s97 = sshll.u32 %s9, 4
      %s98 = int_to_ptr.hbm [resolvable:$true] %s97
      %s99 = sshll.u32 [#allocation11], 4
      %s100 = int_to_ptr.vmem [resolvable:$true] %s99
      %102 = dma.hbm_to_vmem [thread:$0]  %s98, 16, %s100, [#allocation12]
    $region41: #{critic_forward.1} parent=1 // pred_fallthru
      _
    // Predicated region
    $region42: #{critic_forward.1} parent=1 // pred_check
      _
    $region43: #{critic_forward.1} parent=1 // pred_check_branch
      %104 = sbr.rel (0) target = $region45
    $region44: #{critic_forward.1} parent=1 // pred_region
      _
    $region45: #{critic_forward.1} parent=1 // pred_fallthru
      _
    // Predicated region
    $region46: #{critic_forward.1} parent=1 // pred_check
      _
    $region47: #{critic_forward.1} parent=1 // pred_check_branch
      %106 = sbr.rel (0) target = $region49
    $region48: #{critic_forward.1} parent=1 // pred_region
      _
    $region49: #{critic_forward.1} parent=1 // pred_fallthru
      _
    // Predicated region
    $region50: #{critic_forward.1} parent=1 // pred_check
      _
    $region51: #{critic_forward.1} parent=1 // pred_check_branch
      %108 = sbr.rel (0) target = $region53
    $region52: #{critic_forward.1} parent=1 // pred_region
      %110 = dma.done [#allocation4], 256
    $region53: #{critic_forward.1} parent=1 // pred_fallthru
      _
    // Predicated region
    $region54: #{critic_forward.1} parent=1 // pred_check
      _
    $region55: #{critic_forward.1} parent=1 // pred_check_branch
      %112 = sbr.rel (0) target = $region57
    $region56: #{critic_forward.1} parent=1 // pred_region
      %114 = dma.done [#allocation6], 32
    $region57: #{critic_forward.1} parent=1 // pred_fallthru
      _
    // Predicated region
    $region58: #{critic_forward.1} parent=1 // pred_check
      _
    $region59: #{critic_forward.1} parent=1 // pred_check_branch
      %116 = sbr.rel (0) target = $region61
    $region60: #{critic_forward.1} parent=1 // pred_region
      %118 = dma.done [#allocation6], 2048
    $region61: #{critic_forward.1} parent=1 // pred_fallthru
      _
    // Predicated region
    $region62: #{critic_forward.1} parent=1 // pred_check
      _
    $region63: #{critic_forward.1} parent=1 // pred_check_branch
      %120 = sbr.rel (0) target = $region65
    $region64: #{critic_forward.1} parent=1 // pred_region
      %122 = dma.done [#allocation9], 16
    $region65: #{critic_forward.1} parent=1 // pred_fallthru
      _
    // Predicated region
    $region66: #{critic_forward.1} parent=1 // pred_check
      _
    $region67: #{critic_forward.1} parent=1 // pred_check_branch
      %124 = sbr.rel (0) target = $region69
    $region68: #{critic_forward.1} parent=1 // pred_region
      %126 = dma.done [#allocation9], 2048
    $region69: #{critic_forward.1} parent=1 // pred_fallthru
      _
    // Predicated region
    $region70: #{critic_forward.1} parent=1 // pred_check
      _
    $region71: #{critic_forward.1} parent=1 // pred_check_branch
      %128 = sbr.rel (0) target = $region73
    $region72: #{critic_forward.1} parent=1 // pred_region
      %130 = dma.done [#allocation12], 16
    $region73: #{critic_forward.1} parent=1 // pred_fallthru
      _
    %v132 = vld [vmem:[%s0] sm:$0xff]
    %v133 = vld [vmem:[%s0 + $0x8] sm:$0xff]
    %v134 = vld [vmem:[%s0 + $0x10] sm:$0xff]
    %v135 = vld [vmem:[%s0 + $0x18] sm:$0xff]
    %v136 = vld [vmem:[%s0 + $0x20] sm:$0xff]
    %v137 = vld [vmem:[%s0 + $0x28] sm:$0xff]
    %v138 = vld [vmem:[%s0 + $0x30] sm:$0xff]
    %v139 = vld [vmem:[%s0 + $0x38] sm:$0xff]
    %v140 = vld [vmem:[%s0 + $0x40] sm:$0xff]
    %v141 = vld [vmem:[%s0 + $0x48] sm:$0xff]
    %v142 = vld [vmem:[%s0 + $0x50] sm:$0xff]
    %v143 = vld [vmem:[%s0 + $0x58] sm:$0xff]
    %v144 = vld [vmem:[%s0 + $0x60] sm:$0xff]
    %v145 = vld [vmem:[%s0 + $0x68] sm:$0xff]
    %v146 = vld [vmem:[%s0 + $0x70] sm:$0xff]
    %v147 = vld [vmem:[%s0 + $0x78] sm:$0xff]
    %v148 = vpack.c.bf16 %v133, %v132
    %v149 = vpack.c.bf16 %v135, %v134
    %v150 = vpack.c.bf16 %v137, %v136
    %v151 = vpack.c.bf16 %v139, %v138
    %v152 = vpack.c.bf16 %v141, %v140
    %v153 = vpack.c.bf16 %v143, %v142
    %v154 = vpack.c.bf16 %v145, %v144
    %v155 = vpack.c.bf16 %v147, %v146
    %v156 = vld [vmem:[%s1] sm:$0xff]
    %v157 = vld [vmem:[%s1 + $0x8] sm:$0xff]
    %v158 = vld [vmem:[%s1 + $0x10] sm:$0xff]
    %v159 = vld [vmem:[%s1 + $0x18] sm:$0xff]
    %v160 = vld [vmem:[%s1 + $0x20] sm:$0xff]
    %v161 = vld [vmem:[%s1 + $0x28] sm:$0xff]
    %v162 = vld [vmem:[%s1 + $0x30] sm:$0xff]
    %v163 = vld [vmem:[%s1 + $0x38] sm:$0xff]
    %v164 = vld [vmem:[%s1 + $0x40] sm:$0xff]
    %v165 = vld [vmem:[%s1 + $0x48] sm:$0xff]
    %v166 = vld [vmem:[%s1 + $0x50] sm:$0xff]
    %v167 = vld [vmem:[%s1 + $0x58] sm:$0xff]
    %v168 = vld [vmem:[%s1 + $0x60] sm:$0xff]
    %v169 = vld [vmem:[%s1 + $0x68] sm:$0xff]
    %v170 = vld [vmem:[%s1 + $0x70] sm:$0xff]
    %v171 = vld [vmem:[%s1 + $0x78] sm:$0xff]
    %v172 = vpack.c.bf16 %v157, %v156
    %v173 = vpack.c.bf16 %v159, %v158
    %v174 = vpack.c.bf16 %v161, %v160
    %v175 = vpack.c.bf16 %v163, %v162
    %v176 = vpack.c.bf16 %v165, %v164
    %v177 = vpack.c.bf16 %v167, %v166
    %v178 = vpack.c.bf16 %v169, %v168
    %v179 = vpack.c.bf16 %v171, %v170
    %v180 = vld [vmem:[#allocation3] sm:$0xff]
    %v181 = vld [vmem:[#allocation3 + $0x8] sm:$0xff]
    %v182 = vld [vmem:[%s3] sm:$0x3]
    %v184 = vperm.slane %v182, 0
    %v185 = vperm.slane %v182, 1
    %v190 = vunpack.c.l.b16 %v180
    %v191 = vunpack.c.h.b16 %v180
    %v192 = vunpack.c.l.b16 %v181
    %v193 = vunpack.c.h.b16 %v181
    %v194 = vpack.c.b16 %v192, %v190
    %v195 = vpack.c.b16 %v193, %v191
    %vm198 = vcmask 130048
    %v200 = vsel %vm198, %v148, 0
    %v203 = vsel %vm198, %v149, 0
    %v206 = vsel %vm198, %v150, 0
    %v209 = vsel %vm198, %v151, 0
    %v212 = vsel %vm198, %v152, 0
    %v215 = vsel %vm198, %v153, 0
    %v218 = vsel %vm198, %v154, 0
    %v221 = vsel %vm198, %v155, 0
    %223 = vmatpush.bf16.msra.mxu0 0
    %224 = vmatpush.bf16.msra.mxu0 0
    %225 = vmatpush.bf16.msra.mxu0 0
    %226 = vmatpush.bf16.msra.mxu0 0
    %227 = vmatpush.bf16.msra.mxu0 0
    %228 = vmatpush.bf16.msra.mxu0 0
    %229 = vmatpush.bf16.msra.mxu0 0
    %230 = vmatpush.bf16.msra.mxu0 %v194
    %231 = vmatmul.bf16.gmra.mxu0 %v200
    %v232 = vpop.f32.mrf.mxu0
    %v233 = vadd.f32 %v184, %v232
    %v234 = vpop.f32.mrf.mxu0
    %v235 = vadd.f32 %v184, %v234
    %236 = vmatmul.bf16.gmra.mxu0 %v203
    %v237 = vpop.f32.mrf.mxu0
    %v238 = vadd.f32 %v184, %v237
    %v239 = vpop.f32.mrf.mxu0
    %v240 = vadd.f32 %v184, %v239
    %241 = vmatmul.bf16.gmra.mxu0 %v206
    %v242 = vpop.f32.mrf.mxu0
    %v243 = vadd.f32 %v184, %v242
    %v244 = vpop.f32.mrf.mxu0
    %v245 = vadd.f32 %v184, %v244
    %246 = vmatmul.bf16.gmra.mxu0 %v209
    %v247 = vpop.f32.mrf.mxu0
    %v248 = vadd.f32 %v184, %v247
    %v249 = vpop.f32.mrf.mxu0
    %v250 = vadd.f32 %v184, %v249
    %251 = vmatmul.bf16.gmra.mxu0 %v212
    %v252 = vpop.f32.mrf.mxu0
    %v253 = vadd.f32 %v184, %v252
    %v254 = vpop.f32.mrf.mxu0
    %v255 = vadd.f32 %v184, %v254
    %256 = vmatmul.bf16.gmra.mxu0 %v215
    %v257 = vpop.f32.mrf.mxu0
    %v258 = vadd.f32 %v184, %v257
    %v259 = vpop.f32.mrf.mxu0
    %v260 = vadd.f32 %v184, %v259
    %261 = vmatmul.bf16.gmra.mxu0 %v218
    %v262 = vpop.f32.mrf.mxu0
    %v263 = vadd.f32 %v184, %v262
    %v264 = vpop.f32.mrf.mxu0
    %v265 = vadd.f32 %v184, %v264
    %266 = vmatmul.bf16.gmra.mxu0 %v221
    %v267 = vpop.f32.mrf.mxu0
    %v268 = vadd.f32 %v184, %v267
    %v269 = vpop.f32.mrf.mxu0
    %v270 = vadd.f32 %v184, %v269
    %271 = vdwg.mxu0
    %272 = vmatpush.bf16.msra.mxu0 0
    %273 = vmatpush.bf16.msra.mxu0 0
    %274 = vmatpush.bf16.msra.mxu0 0
    %275 = vmatpush.bf16.msra.mxu0 0
    %276 = vmatpush.bf16.msra.mxu0 0
    %277 = vmatpush.bf16.msra.mxu0 0
    %278 = vmatpush.bf16.msra.mxu0 0
    %279 = vmatpush.bf16.msra.mxu0 %v195
    %280 = vmatmul.bf16.gmra.mxu0 %v200
    %v281 = vpop.f32.mrf.mxu0
    %v282 = vadd.f32 %v185, %v281
    %v283 = vpop.f32.mrf.mxu0
    %v284 = vadd.f32 %v185, %v283
    %285 = vmatmul.bf16.gmra.mxu0 %v203
    %v286 = vpop.f32.mrf.mxu0
    %v287 = vadd.f32 %v185, %v286
    %v288 = vpop.f32.mrf.mxu0
    %v289 = vadd.f32 %v185, %v288
    %290 = vmatmul.bf16.gmra.mxu0 %v206
    %v291 = vpop.f32.mrf.mxu0
    %v292 = vadd.f32 %v185, %v291
    %v293 = vpop.f32.mrf.mxu0
    %v294 = vadd.f32 %v185, %v293
    %295 = vmatmul.bf16.gmra.mxu0 %v209
    %v296 = vpop.f32.mrf.mxu0
    %v297 = vadd.f32 %v185, %v296
    %v298 = vpop.f32.mrf.mxu0
    %v299 = vadd.f32 %v185, %v298
    %300 = vmatmul.bf16.gmra.mxu0 %v212
    %v301 = vpop.f32.mrf.mxu0
    %v302 = vadd.f32 %v185, %v301
    %v303 = vpop.f32.mrf.mxu0
    %v304 = vadd.f32 %v185, %v303
    %305 = vmatmul.bf16.gmra.mxu0 %v215
    %v306 = vpop.f32.mrf.mxu0
    %v307 = vadd.f32 %v185, %v306
    %v308 = vpop.f32.mrf.mxu0
    %v309 = vadd.f32 %v185, %v308
    %310 = vmatmul.bf16.gmra.mxu0 %v218
    %v311 = vpop.f32.mrf.mxu0
    %v312 = vadd.f32 %v185, %v311
    %v313 = vpop.f32.mrf.mxu0
    %v314 = vadd.f32 %v185, %v313
    %315 = vmatmul.bf16.gmra.mxu0 %v221
    %v316 = vpop.f32.mrf.mxu0
    %v317 = vadd.f32 %v185, %v316
    %v318 = vpop.f32.mrf.mxu0
    %v319 = vadd.f32 %v185, %v318
    %320 = vdwg.mxu0
    %v321 = vmax.f32 %v233, 0.0
    %v322 = vmax.f32 %v282, 0.0
    %v323 = vmax.f32 %v235, 0.0
    %v324 = vmax.f32 %v284, 0.0
    %v325 = vmax.f32 %v238, 0.0
    %v326 = vmax.f32 %v287, 0.0
    %v327 = vmax.f32 %v240, 0.0
    %v328 = vmax.f32 %v289, 0.0
    %v329 = vmax.f32 %v243, 0.0
    %v330 = vmax.f32 %v292, 0.0
    %v331 = vmax.f32 %v245, 0.0
    %v332 = vmax.f32 %v294, 0.0
    %v333 = vmax.f32 %v248, 0.0
    %v334 = vmax.f32 %v297, 0.0
    %v335 = vmax.f32 %v250, 0.0
    %v336 = vmax.f32 %v299, 0.0
    %v337 = vmax.f32 %v253, 0.0
    %v338 = vmax.f32 %v302, 0.0
    %v339 = vmax.f32 %v255, 0.0
    %v340 = vmax.f32 %v304, 0.0
    %v341 = vmax.f32 %v258, 0.0
    %v342 = vmax.f32 %v307, 0.0
    %v343 = vmax.f32 %v260, 0.0
    %v344 = vmax.f32 %v309, 0.0
    %v345 = vmax.f32 %v263, 0.0
    %v346 = vmax.f32 %v312, 0.0
    %v347 = vmax.f32 %v265, 0.0
    %v348 = vmax.f32 %v314, 0.0
    %v349 = vmax.f32 %v268, 0.0
    %v350 = vmax.f32 %v317, 0.0
    %v351 = vmax.f32 %v270, 0.0
    %v352 = vmax.f32 %v319, 0.0
    %v353 = vld [vmem:[#allocation5] sm:$0x3]
    %v354 = vld [vmem:[%s5] sm:$0x1]
    %v356 = vperm.slane %v354, 0
    %vm358 = vcmask 31744
    %v360 = vsel %vm358, %v172, 0
    %v363 = vsel %vm358, %v173, 0
    %v366 = vsel %vm358, %v174, 0
    %v369 = vsel %vm358, %v175, 0
    %v372 = vsel %vm358, %v176, 0
    %v375 = vsel %vm358, %v177, 0
    %v378 = vsel %vm358, %v178, 0
    %v381 = vsel %vm358, %v179, 0
    %vm383 = vcmask 1041408
    %v385 = vsel %vm383, %v353, 0
    %387 = vmatpush.bf16.msra.mxu0 0
    %388 = vmatpush.bf16.msra.mxu0 0
    %389 = vmatpush.bf16.msra.mxu0 0
    %390 = vmatpush.bf16.msra.mxu0 0
    %391 = vmatpush.bf16.msra.mxu0 0
    %392 = vmatpush.bf16.msra.mxu0 0
    %393 = vmatpush.bf16.msra.mxu0 0
    %394 = vmatpush.bf16.msra.mxu0 %v385
    %395 = vmatmul.bf16.gmra.mxu0 %v360
    %v396 = vpop.f32.mrf.mxu0
    %v397 = vadd.f32 %v356, %v396
    %v398 = vpop.f32.mrf.mxu0
    %v399 = vadd.f32 %v356, %v398
    %400 = vmatmul.bf16.gmra.mxu0 %v363
    %v401 = vpop.f32.mrf.mxu0
    %v402 = vadd.f32 %v356, %v401
    %v403 = vpop.f32.mrf.mxu0
    %v404 = vadd.f32 %v356, %v403
    %405 = vmatmul.bf16.gmra.mxu0 %v366
    %v406 = vpop.f32.mrf.mxu0
    %v407 = vadd.f32 %v356, %v406
    %v408 = vpop.f32.mrf.mxu0
    %v409 = vadd.f32 %v356, %v408
    %410 = vmatmul.bf16.gmra.mxu0 %v369
    %v411 = vpop.f32.mrf.mxu0
    %v412 = vadd.f32 %v356, %v411
    %v413 = vpop.f32.mrf.mxu0
    %v414 = vadd.f32 %v356, %v413
    %415 = vmatmul.bf16.gmra.mxu0 %v372
    %v416 = vpop.f32.mrf.mxu0
    %v417 = vadd.f32 %v356, %v416
    %v418 = vpop.f32.mrf.mxu0
    %v419 = vadd.f32 %v356, %v418
    %420 = vmatmul.bf16.gmra.mxu0 %v375
    %v421 = vpop.f32.mrf.mxu0
    %v422 = vadd.f32 %v356, %v421
    %v423 = vpop.f32.mrf.mxu0
    %v424 = vadd.f32 %v356, %v423
    %425 = vmatmul.bf16.gmra.mxu0 %v378
    %v426 = vpop.f32.mrf.mxu0
    %v427 = vadd.f32 %v356, %v426
    %v428 = vpop.f32.mrf.mxu0
    %v429 = vadd.f32 %v356, %v428
    %430 = vmatmul.bf16.gmra.mxu0 %v381
    %v431 = vpop.f32.mrf.mxu0
    %v432 = vadd.f32 %v356, %v431
    %v433 = vpop.f32.mrf.mxu0
    %v434 = vadd.f32 %v356, %v433
    %435 = vdwg.mxu0
    %v436 = vmax.f32 %v397, 0.0
    %v437 = vmax.f32 %v399, 0.0
    %v438 = vmax.f32 %v402, 0.0
    %v439 = vmax.f32 %v404, 0.0
    %v440 = vmax.f32 %v407, 0.0
    %v441 = vmax.f32 %v409, 0.0
    %v442 = vmax.f32 %v412, 0.0
    %v443 = vmax.f32 %v414, 0.0
    %v444 = vmax.f32 %v417, 0.0
    %v445 = vmax.f32 %v419, 0.0
    %v446 = vmax.f32 %v422, 0.0
    %v447 = vmax.f32 %v424, 0.0
    %v448 = vmax.f32 %v427, 0.0
    %v449 = vmax.f32 %v429, 0.0
    %v450 = vmax.f32 %v432, 0.0
    %v451 = vmax.f32 %v434, 0.0
    %v452 = vpack.c.bf16 %v323, %v321
    %v453 = vpack.c.bf16 %v324, %v322
    %v454 = vpack.c.bf16 %v327, %v325
    %v455 = vpack.c.bf16 %v328, %v326
    %v456 = vpack.c.bf16 %v331, %v329
    %v457 = vpack.c.bf16 %v332, %v330
    %v458 = vpack.c.bf16 %v335, %v333
    %v459 = vpack.c.bf16 %v336, %v334
    %v460 = vpack.c.bf16 %v339, %v337
    %v461 = vpack.c.bf16 %v340, %v338
    %v462 = vpack.c.bf16 %v343, %v341
    %v463 = vpack.c.bf16 %v344, %v342
    %v464 = vpack.c.bf16 %v347, %v345
    %v465 = vpack.c.bf16 %v348, %v346
    %v466 = vpack.c.bf16 %v351, %v349
    %v467 = vpack.c.bf16 %v352, %v350
    %v468 = vld [vmem:[#allocation7] sm:$0xf]
    %v469 = vld [vmem:[#allocation7 + $0x4] sm:$0xf]
    %v470 = vld [vmem:[#allocation7 + $0x8] sm:$0xf]
    %v471 = vld [vmem:[#allocation7 + $0xc] sm:$0xf]
    %v472 = vld [vmem:[#allocation7 + $0x10] sm:$0xf]
    %v473 = vld [vmem:[#allocation7 + $0x14] sm:$0xf]
    %v474 = vld [vmem:[#allocation7 + $0x18] sm:$0xf]
    %v475 = vld [vmem:[#allocation7 + $0x1c] sm:$0xf]
    %v476 = vld [vmem:[#allocation7 + $0x20] sm:$0xf]
    %v477 = vld [vmem:[#allocation7 + $0x24] sm:$0xf]
    %v478 = vld [vmem:[#allocation7 + $0x28] sm:$0xf]
    %v479 = vld [vmem:[#allocation7 + $0x2c] sm:$0xf]
    %v480 = vld [vmem:[#allocation7 + $0x30] sm:$0xf]
    %v481 = vld [vmem:[#allocation7 + $0x34] sm:$0xf]
    %v482 = vld [vmem:[#allocation7 + $0x38] sm:$0xf]
    %v483 = vld [vmem:[#allocation7 + $0x3c] sm:$0xf]
    %v484 = vld [vmem:[#allocation7 + $0x40] sm:$0xf]
    %v485 = vld [vmem:[#allocation7 + $0x44] sm:$0xf]
    %v486 = vld [vmem:[#allocation7 + $0x48] sm:$0xf]
    %v487 = vld [vmem:[#allocation7 + $0x4c] sm:$0xf]
    %v488 = vld [vmem:[#allocation7 + $0x50] sm:$0xf]
    %v489 = vld [vmem:[#allocation7 + $0x54] sm:$0xf]
    %v490 = vld [vmem:[#allocation7 + $0x58] sm:$0xf]
    %v491 = vld [vmem:[#allocation7 + $0x5c] sm:$0xf]
    %v492 = vld [vmem:[#allocation7 + $0x60] sm:$0xf]
    %v493 = vld [vmem:[#allocation7 + $0x64] sm:$0xf]
    %v494 = vld [vmem:[#allocation7 + $0x68] sm:$0xf]
    %v495 = vld [vmem:[#allocation7 + $0x6c] sm:$0xf]
    %v496 = vld [vmem:[#allocation7 + $0x70] sm:$0xf]
    %v497 = vld [vmem:[#allocation7 + $0x74] sm:$0xf]
    %v498 = vld [vmem:[#allocation7 + $0x78] sm:$0xf]
    %v499 = vld [vmem:[#allocation7 + $0x7c] sm:$0xf]
    %v500 = vld [vmem:[#allocation8] sm:$0x1]
    %v502 = vperm.slane %v500, 0
    %v536 = vunpack.c.l.b16 %v468
    %v537 = vunpack.c.l.b16 %v469
    %v538 = vunpack.c.l.b16 %v470
    %v539 = vunpack.c.l.b16 %v471
    %v540 = vunpack.c.l.b16 %v472
    %v541 = vunpack.c.l.b16 %v473
    %v542 = vunpack.c.l.b16 %v474
    %v543 = vunpack.c.l.b16 %v475
    %v544 = vunpack.c.l.b16 %v476
    %v545 = vunpack.c.l.b16 %v477
    %v546 = vunpack.c.l.b16 %v478
    %v547 = vunpack.c.l.b16 %v479
    %v548 = vunpack.c.l.b16 %v480
    %v549 = vunpack.c.l.b16 %v481
    %v550 = vunpack.c.l.b16 %v482
    %v551 = vunpack.c.l.b16 %v483
    %v552 = vunpack.c.l.b16 %v484
    %v553 = vunpack.c.l.b16 %v485
    %v554 = vunpack.c.l.b16 %v486
    %v555 = vunpack.c.l.b16 %v487
    %v556 = vunpack.c.l.b16 %v488
    %v557 = vunpack.c.l.b16 %v489
    %v558 = vunpack.c.l.b16 %v490
    %v559 = vunpack.c.l.b16 %v491
    %v560 = vunpack.c.l.b16 %v492
    %v561 = vunpack.c.l.b16 %v493
    %v562 = vunpack.c.l.b16 %v494
    %v563 = vunpack.c.l.b16 %v495
    %v564 = vunpack.c.l.b16 %v496
    %v565 = vunpack.c.l.b16 %v497
    %v566 = vunpack.c.l.b16 %v498
    %v567 = vunpack.c.l.b16 %v499
    %v568 = vpack.c.b16 %v537, %v536
    %v569 = vpack.c.b16 %v539, %v538
    %v570 = vpack.c.b16 %v541, %v540
    %v571 = vpack.c.b16 %v543, %v542
    %v572 = vpack.c.b16 %v545, %v544
    %v573 = vpack.c.b16 %v547, %v546
    %v574 = vpack.c.b16 %v549, %v548
    %v575 = vpack.c.b16 %v551, %v550
    %v576 = vpack.c.b16 %v553, %v552
    %v577 = vpack.c.b16 %v555, %v554
    %v578 = vpack.c.b16 %v557, %v556
    %v579 = vpack.c.b16 %v559, %v558
    %v580 = vpack.c.b16 %v561, %v560
    %v581 = vpack.c.b16 %v563, %v562
    %v582 = vpack.c.b16 %v565, %v564
    %v583 = vpack.c.b16 %v567, %v566
    %600 = vmatpush.bf16.msra.mxu0 %v575
    %601 = vmatpush.bf16.msra.mxu0 %v574
    %602 = vmatpush.bf16.msra.mxu0 %v573
    %603 = vmatpush.bf16.msra.mxu0 %v572
    %604 = vmatpush.bf16.msra.mxu0 %v571
    %605 = vmatpush.bf16.msra.mxu0 %v570
    %606 = vmatpush.bf16.msra.mxu0 %v569
    %607 = vmatpush.bf16.msra.mxu0 %v568
    %608 = vmatmul.bf16.gmra.mxu0 %v452
    %v609 = vpop.f32.mrf.mxu0
    %v610 = vadd.f32 %v502, %v609
    %v611 = vpop.f32.mrf.mxu0
    %v612 = vadd.f32 %v502, %v611
    %613 = vmatmul.bf16.gmra.mxu0 %v454
    %v614 = vpop.f32.mrf.mxu0
    %v615 = vadd.f32 %v502, %v614
    %v616 = vpop.f32.mrf.mxu0
    %v617 = vadd.f32 %v502, %v616
    %618 = vmatmul.bf16.gmra.mxu0 %v456
    %v619 = vpop.f32.mrf.mxu0
    %v620 = vadd.f32 %v502, %v619
    %v621 = vpop.f32.mrf.mxu0
    %v622 = vadd.f32 %v502, %v621
    %623 = vmatmul.bf16.gmra.mxu0 %v458
    %v624 = vpop.f32.mrf.mxu0
    %v625 = vadd.f32 %v502, %v624
    %v626 = vpop.f32.mrf.mxu0
    %v627 = vadd.f32 %v502, %v626
    %628 = vmatmul.bf16.gmra.mxu0 %v460
    %v629 = vpop.f32.mrf.mxu0
    %v630 = vadd.f32 %v502, %v629
    %v631 = vpop.f32.mrf.mxu0
    %v632 = vadd.f32 %v502, %v631
    %633 = vmatmul.bf16.gmra.mxu0 %v462
    %v634 = vpop.f32.mrf.mxu0
    %v635 = vadd.f32 %v502, %v634
    %v636 = vpop.f32.mrf.mxu0
    %v637 = vadd.f32 %v502, %v636
    %638 = vmatmul.bf16.gmra.mxu0 %v464
    %v639 = vpop.f32.mrf.mxu0
    %v640 = vadd.f32 %v502, %v639
    %v641 = vpop.f32.mrf.mxu0
    %v642 = vadd.f32 %v502, %v641
    %643 = vmatmul.bf16.gmra.mxu0 %v466
    %v644 = vpop.f32.mrf.mxu0
    %v645 = vadd.f32 %v502, %v644
    %v646 = vpop.f32.mrf.mxu0
    %v647 = vadd.f32 %v502, %v646
    %648 = vdwg.mxu0
    %649 = vmatpush.bf16.msra.mxu0 %v583
    %650 = vmatpush.bf16.msra.mxu0 %v582
    %651 = vmatpush.bf16.msra.mxu0 %v581
    %652 = vmatpush.bf16.msra.mxu0 %v580
    %653 = vmatpush.bf16.msra.mxu0 %v579
    %654 = vmatpush.bf16.msra.mxu0 %v578
    %655 = vmatpush.bf16.msra.mxu0 %v577
    %656 = vmatpush.bf16.msra.mxu0 %v576
    %657 = vmatmul.bf16.gmra.mxu0 %v453
    %v658 = vpop.f32.mrf.mxu0
    %v659 = vadd.f32 %v610, %v658
    %v660 = vpop.f32.mrf.mxu0
    %v661 = vadd.f32 %v612, %v660
    %662 = vmatmul.bf16.gmra.mxu0 %v455
    %v663 = vpop.f32.mrf.mxu0
    %v664 = vadd.f32 %v615, %v663
    %v665 = vpop.f32.mrf.mxu0
    %v666 = vadd.f32 %v617, %v665
    %667 = vmatmul.bf16.gmra.mxu0 %v457
    %v668 = vpop.f32.mrf.mxu0
    %v669 = vadd.f32 %v620, %v668
    %v670 = vpop.f32.mrf.mxu0
    %v671 = vadd.f32 %v622, %v670
    %672 = vmatmul.bf16.gmra.mxu0 %v459
    %v673 = vpop.f32.mrf.mxu0
    %v674 = vadd.f32 %v625, %v673
    %v675 = vpop.f32.mrf.mxu0
    %v676 = vadd.f32 %v627, %v675
    %677 = vmatmul.bf16.gmra.mxu0 %v461
    %v678 = vpop.f32.mrf.mxu0
    %v679 = vadd.f32 %v630, %v678
    %v680 = vpop.f32.mrf.mxu0
    %v681 = vadd.f32 %v632, %v680
    %682 = vmatmul.bf16.gmra.mxu0 %v463
    %v683 = vpop.f32.mrf.mxu0
    %v684 = vadd.f32 %v635, %v683
    %v685 = vpop.f32.mrf.mxu0
    %v686 = vadd.f32 %v637, %v685
    %687 = vmatmul.bf16.gmra.mxu0 %v465
    %v688 = vpop.f32.mrf.mxu0
    %v689 = vadd.f32 %v640, %v688
    %v690 = vpop.f32.mrf.mxu0
    %v691 = vadd.f32 %v642, %v690
    %692 = vmatmul.bf16.gmra.mxu0 %v467
    %v693 = vpop.f32.mrf.mxu0
    %v694 = vadd.f32 %v645, %v693
    %v695 = vpop.f32.mrf.mxu0
    %v696 = vadd.f32 %v647, %v695
    %697 = vdwg.mxu0
    %v698 = vmax.f32 %v659, 0.0
    %v699 = vmax.f32 %v661, 0.0
    %v700 = vmax.f32 %v664, 0.0
    %v701 = vmax.f32 %v666, 0.0
    %v702 = vmax.f32 %v669, 0.0
    %v703 = vmax.f32 %v671, 0.0
    %v704 = vmax.f32 %v674, 0.0
    %v705 = vmax.f32 %v676, 0.0
    %v706 = vmax.f32 %v679, 0.0
    %v707 = vmax.f32 %v681, 0.0
    %v708 = vmax.f32 %v684, 0.0
    %v709 = vmax.f32 %v686, 0.0
    %v710 = vmax.f32 %v689, 0.0
    %v711 = vmax.f32 %v691, 0.0
    %v712 = vmax.f32 %v694, 0.0
    %v713 = vmax.f32 %v696, 0.0
    %v714 = vpack.c.bf16 %v698, %v698
    %v715 = vpack.c.bf16 %v699, %v699
    %v716 = vpack.c.bf16 %v700, %v700
    %v717 = vpack.c.bf16 %v701, %v701
    %v718 = vpack.c.bf16 %v702, %v702
    %v719 = vpack.c.bf16 %v703, %v703
    %v720 = vpack.c.bf16 %v704, %v704
    %v721 = vpack.c.bf16 %v705, %v705
    %v722 = vpack.c.bf16 %v706, %v706
    %v723 = vpack.c.bf16 %v707, %v707
    %v724 = vpack.c.bf16 %v708, %v708
    %v725 = vpack.c.bf16 %v709, %v709
    %v726 = vpack.c.bf16 %v710, %v710
    %v727 = vpack.c.bf16 %v711, %v711
    %v728 = vpack.c.bf16 %v712, %v712
    %v729 = vpack.c.bf16 %v713, %v713
    %v730 = vpack.c.bf16 %v436, %v436
    %v731 = vpack.c.bf16 %v437, %v437
    %v732 = vpack.c.bf16 %v438, %v438
    %v733 = vpack.c.bf16 %v439, %v439
    %v734 = vpack.c.bf16 %v440, %v440
    %v735 = vpack.c.bf16 %v441, %v441
    %v736 = vpack.c.bf16 %v442, %v442
    %v737 = vpack.c.bf16 %v443, %v443
    %v738 = vpack.c.bf16 %v444, %v444
    %v739 = vpack.c.bf16 %v445, %v445
    %v740 = vpack.c.bf16 %v446, %v446
    %v741 = vpack.c.bf16 %v447, %v447
    %v742 = vpack.c.bf16 %v448, %v448
    %v743 = vpack.c.bf16 %v449, %v449
    %v744 = vpack.c.bf16 %v450, %v450
    %v745 = vpack.c.bf16 %v451, %v451
    %v762 = vunpack.c.l.b16 %v714
    %v763 = vunpack.c.l.b16 %v715
    %v764 = vunpack.c.l.b16 %v716
    %v765 = vunpack.c.l.b16 %v717
    %v766 = vunpack.c.l.b16 %v718
    %v767 = vunpack.c.l.b16 %v719
    %v768 = vunpack.c.l.b16 %v720
    %v769 = vunpack.c.l.b16 %v721
    %v770 = vunpack.c.l.b16 %v722
    %v771 = vunpack.c.l.b16 %v723
    %v772 = vunpack.c.l.b16 %v724
    %v773 = vunpack.c.l.b16 %v725
    %v774 = vunpack.c.l.b16 %v726
    %v775 = vunpack.c.l.b16 %v727
    %v776 = vunpack.c.l.b16 %v728
    %v777 = vunpack.c.l.b16 %v729
    %v778 = vpack.c.b16 %v763, %v762
    %v779 = vpack.c.b16 %v765, %v764
    %v780 = vpack.c.b16 %v767, %v766
    %v781 = vpack.c.b16 %v769, %v768
    %v782 = vpack.c.b16 %v771, %v770
    %v783 = vpack.c.b16 %v773, %v772
    %v784 = vpack.c.b16 %v775, %v774
    %v785 = vpack.c.b16 %v777, %v776
    %v810 = vunpack.c.l.b16 %v730
    %v811 = vunpack.c.l.b16 %v731
    %v812 = vunpack.c.l.b16 %v732
    %v813 = vunpack.c.l.b16 %v733
    %v814 = vunpack.c.l.b16 %v734
    %v815 = vunpack.c.l.b16 %v735
    %v816 = vunpack.c.l.b16 %v736
    %v817 = vunpack.c.l.b16 %v737
    %v818 = vunpack.c.l.b16 %v738
    %v819 = vunpack.c.l.b16 %v739
    %v820 = vunpack.c.l.b16 %v740
    %v821 = vunpack.c.l.b16 %v741
    %v822 = vunpack.c.l.b16 %v742
    %v823 = vunpack.c.l.b16 %v743
    %v824 = vunpack.c.l.b16 %v744
    %v825 = vunpack.c.l.b16 %v745
    %v826 = vpack.c.b16 %v811, %v810
    %v827 = vpack.c.b16 %v813, %v812
    %v828 = vpack.c.b16 %v815, %v814
    %v829 = vpack.c.b16 %v817, %v816
    %v830 = vpack.c.b16 %v819, %v818
    %v831 = vpack.c.b16 %v821, %v820
    %v832 = vpack.c.b16 %v823, %v822
    %v833 = vpack.c.b16 %v825, %v824
    %v842 = vld [vmem:[#allocation10] sm:$0xf]
    %v843 = vld [vmem:[#allocation10 + $0x4] sm:$0xf]
    %v844 = vld [vmem:[#allocation10 + $0x8] sm:$0xf]
    %v845 = vld [vmem:[#allocation10 + $0xc] sm:$0xf]
    %v846 = vld [vmem:[#allocation10 + $0x10] sm:$0xf]
    %v847 = vld [vmem:[#allocation10 + $0x14] sm:$0xf]
    %v848 = vld [vmem:[#allocation10 + $0x18] sm:$0xf]
    %v849 = vld [vmem:[#allocation10 + $0x1c] sm:$0xf]
    %v850 = vld [vmem:[#allocation10 + $0x20] sm:$0xf]
    %v851 = vld [vmem:[#allocation10 + $0x24] sm:$0xf]
    %v852 = vld [vmem:[#allocation10 + $0x28] sm:$0xf]
    %v853 = vld [vmem:[#allocation10 + $0x2c] sm:$0xf]
    %v854 = vld [vmem:[#allocation10 + $0x30] sm:$0xf]
    %v855 = vld [vmem:[#allocation10 + $0x34] sm:$0xf]
    %v856 = vld [vmem:[#allocation10 + $0x38] sm:$0xf]
    %v857 = vld [vmem:[#allocation10 + $0x3c] sm:$0xf]
    %v858 = vld [vmem:[#allocation10 + $0x40] sm:$0xf]
    %v859 = vld [vmem:[#allocation10 + $0x44] sm:$0xf]
    %v860 = vld [vmem:[#allocation10 + $0x48] sm:$0xf]
    %v861 = vld [vmem:[#allocation10 + $0x4c] sm:$0xf]
    %v862 = vld [vmem:[#allocation10 + $0x50] sm:$0xf]
    %v863 = vld [vmem:[#allocation10 + $0x54] sm:$0xf]
    %v864 = vld [vmem:[#allocation10 + $0x58] sm:$0xf]
    %v865 = vld [vmem:[#allocation10 + $0x5c] sm:$0xf]
    %v866 = vld [vmem:[#allocation10 + $0x60] sm:$0xf]
    %v867 = vld [vmem:[#allocation10 + $0x64] sm:$0xf]
    %v868 = vld [vmem:[#allocation10 + $0x68] sm:$0xf]
    %v869 = vld [vmem:[#allocation10 + $0x6c] sm:$0xf]
    %v870 = vld [vmem:[#allocation10 + $0x70] sm:$0xf]
    %v871 = vld [vmem:[#allocation10 + $0x74] sm:$0xf]
    %v872 = vld [vmem:[#allocation10 + $0x78] sm:$0xf]
    %v873 = vld [vmem:[#allocation10 + $0x7c] sm:$0xf]
    %v874 = vld [vmem:[#allocation11] sm:$0x1]
    %v876 = vperm.slane %v874, 0
    %v910 = vunpack.c.l.b16 %v842
    %v911 = vunpack.c.l.b16 %v843
    %v912 = vunpack.c.l.b16 %v844
    %v913 = vunpack.c.l.b16 %v845
    %v914 = vunpack.c.l.b16 %v846
    %v915 = vunpack.c.l.b16 %v847
    %v916 = vunpack.c.l.b16 %v848
    %v917 = vunpack.c.l.b16 %v849
    %v918 = vunpack.c.l.b16 %v850
    %v919 = vunpack.c.l.b16 %v851
    %v920 = vunpack.c.l.b16 %v852
    %v921 = vunpack.c.l.b16 %v853
    %v922 = vunpack.c.l.b16 %v854
    %v923 = vunpack.c.l.b16 %v855
    %v924 = vunpack.c.l.b16 %v856
    %v925 = vunpack.c.l.b16 %v857
    %v926 = vunpack.c.l.b16 %v858
    %v927 = vunpack.c.l.b16 %v859
    %v928 = vunpack.c.l.b16 %v860
    %v929 = vunpack.c.l.b16 %v861
    %v930 = vunpack.c.l.b16 %v862
    %v931 = vunpack.c.l.b16 %v863
    %v932 = vunpack.c.l.b16 %v864
    %v933 = vunpack.c.l.b16 %v865
    %v934 = vunpack.c.l.b16 %v866
    %v935 = vunpack.c.l.b16 %v867
    %v936 = vunpack.c.l.b16 %v868
    %v937 = vunpack.c.l.b16 %v869
    %v938 = vunpack.c.l.b16 %v870
    %v939 = vunpack.c.l.b16 %v871
    %v940 = vunpack.c.l.b16 %v872
    %v941 = vunpack.c.l.b16 %v873
    %v942 = vpack.c.b16 %v911, %v910
    %v943 = vpack.c.b16 %v913, %v912
    %v944 = vpack.c.b16 %v915, %v914
    %v945 = vpack.c.b16 %v917, %v916
    %v946 = vpack.c.b16 %v919, %v918
    %v947 = vpack.c.b16 %v921, %v920
    %v948 = vpack.c.b16 %v923, %v922
    %v949 = vpack.c.b16 %v925, %v924
    %v950 = vpack.c.b16 %v927, %v926
    %v951 = vpack.c.b16 %v929, %v928
    %v952 = vpack.c.b16 %v931, %v930
    %v953 = vpack.c.b16 %v933, %v932
    %v954 = vpack.c.b16 %v935, %v934
    %v955 = vpack.c.b16 %v937, %v936
    %v956 = vpack.c.b16 %v939, %v938
    %v957 = vpack.c.b16 %v941, %v940
    %974 = vmatpush.bf16.msra.mxu0 %v949
    %975 = vmatpush.bf16.msra.mxu0 %v948
    %976 = vmatpush.bf16.msra.mxu0 %v947
    %977 = vmatpush.bf16.msra.mxu0 %v946
    %978 = vmatpush.bf16.msra.mxu0 %v945
    %979 = vmatpush.bf16.msra.mxu0 %v944
    %980 = vmatpush.bf16.msra.mxu0 %v943
    %981 = vmatpush.bf16.msra.mxu0 %v942
    %982 = vmatmul.bf16.gmra.mxu0 %v778
    %v983 = vpop.f32.mrf.mxu0
    %v984 = vadd.f32 %v876, %v983
    %v985 = vpop.f32.mrf.mxu0
    %v986 = vadd.f32 %v876, %v985
    %987 = vmatmul.bf16.gmra.mxu0 %v779
    %v988 = vpop.f32.mrf.mxu0
    %v989 = vadd.f32 %v876, %v988
    %v990 = vpop.f32.mrf.mxu0
    %v991 = vadd.f32 %v876, %v990
    %992 = vmatmul.bf16.gmra.mxu0 %v780
    %v993 = vpop.f32.mrf.mxu0
    %v994 = vadd.f32 %v876, %v993
    %v995 = vpop.f32.mrf.mxu0
    %v996 = vadd.f32 %v876, %v995
    %997 = vmatmul.bf16.gmra.mxu0 %v781
    %v998 = vpop.f32.mrf.mxu0
    %v999 = vadd.f32 %v876, %v998
    %v1000 = vpop.f32.mrf.mxu0
    %v1001 = vadd.f32 %v876, %v1000
    %1002 = vmatmul.bf16.gmra.mxu0 %v782
    %v1003 = vpop.f32.mrf.mxu0
    %v1004 = vadd.f32 %v876, %v1003
    %v1005 = vpop.f32.mrf.mxu0
    %v1006 = vadd.f32 %v876, %v1005
    %1007 = vmatmul.bf16.gmra.mxu0 %v783
    %v1008 = vpop.f32.mrf.mxu0
    %v1009 = vadd.f32 %v876, %v1008
    %v1010 = vpop.f32.mrf.mxu0
    %v1011 = vadd.f32 %v876, %v1010
    %1012 = vmatmul.bf16.gmra.mxu0 %v784
    %v1013 = vpop.f32.mrf.mxu0
    %v1014 = vadd.f32 %v876, %v1013
    %v1015 = vpop.f32.mrf.mxu0
    %v1016 = vadd.f32 %v876, %v1015
    %1017 = vmatmul.bf16.gmra.mxu0 %v785
    %v1018 = vpop.f32.mrf.mxu0
    %v1019 = vadd.f32 %v876, %v1018
    %v1020 = vpop.f32.mrf.mxu0
    %v1021 = vadd.f32 %v876, %v1020
    %1022 = vdwg.mxu0
    %1023 = vmatpush.bf16.msra.mxu0 %v957
    %1024 = vmatpush.bf16.msra.mxu0 %v956
    %1025 = vmatpush.bf16.msra.mxu0 %v955
    %1026 = vmatpush.bf16.msra.mxu0 %v954
    %1027 = vmatpush.bf16.msra.mxu0 %v953
    %1028 = vmatpush.bf16.msra.mxu0 %v952
    %1029 = vmatpush.bf16.msra.mxu0 %v951
    %1030 = vmatpush.bf16.msra.mxu0 %v950
    %1031 = vmatmul.bf16.gmra.mxu0 %v826
    %v1032 = vpop.f32.mrf.mxu0
    %v1033 = vadd.f32 %v984, %v1032
    %v1034 = vpop.f32.mrf.mxu0
    %v1035 = vadd.f32 %v986, %v1034
    %1036 = vmatmul.bf16.gmra.mxu0 %v827
    %v1037 = vpop.f32.mrf.mxu0
    %v1038 = vadd.f32 %v989, %v1037
    %v1039 = vpop.f32.mrf.mxu0
    %v1040 = vadd.f32 %v991, %v1039
    %1041 = vmatmul.bf16.gmra.mxu0 %v828
    %v1042 = vpop.f32.mrf.mxu0
    %v1043 = vadd.f32 %v994, %v1042
    %v1044 = vpop.f32.mrf.mxu0
    %v1045 = vadd.f32 %v996, %v1044
    %1046 = vmatmul.bf16.gmra.mxu0 %v829
    %v1047 = vpop.f32.mrf.mxu0
    %v1048 = vadd.f32 %v999, %v1047
    %v1049 = vpop.f32.mrf.mxu0
    %v1050 = vadd.f32 %v1001, %v1049
    %1051 = vmatmul.bf16.gmra.mxu0 %v830
    %v1052 = vpop.f32.mrf.mxu0
    %v1053 = vadd.f32 %v1004, %v1052
    %v1054 = vpop.f32.mrf.mxu0
    %v1055 = vadd.f32 %v1006, %v1054
    %1056 = vmatmul.bf16.gmra.mxu0 %v831
    %v1057 = vpop.f32.mrf.mxu0
    %v1058 = vadd.f32 %v1009, %v1057
    %v1059 = vpop.f32.mrf.mxu0
    %v1060 = vadd.f32 %v1011, %v1059
    %1061 = vmatmul.bf16.gmra.mxu0 %v832
    %v1062 = vpop.f32.mrf.mxu0
    %v1063 = vadd.f32 %v1014, %v1062
    %v1064 = vpop.f32.mrf.mxu0
    %v1065 = vadd.f32 %v1016, %v1064
    %1066 = vmatmul.bf16.gmra.mxu0 %v833
    %v1067 = vpop.f32.mrf.mxu0
    %v1068 = vadd.f32 %v1019, %v1067
    %v1069 = vpop.f32.mrf.mxu0
    %v1070 = vadd.f32 %v1021, %v1069
    %1071 = vdwg.mxu0
    %v1072 = vmax.f32 %v1033, 0.0
    %v1073 = vmax.f32 %v1035, 0.0
    %v1074 = vmax.f32 %v1038, 0.0
    %v1075 = vmax.f32 %v1040, 0.0
    %v1076 = vmax.f32 %v1043, 0.0
    %v1077 = vmax.f32 %v1045, 0.0
    %v1078 = vmax.f32 %v1048, 0.0
    %v1079 = vmax.f32 %v1050, 0.0
    %v1080 = vmax.f32 %v1053, 0.0
    %v1081 = vmax.f32 %v1055, 0.0
    %v1082 = vmax.f32 %v1058, 0.0
    %v1083 = vmax.f32 %v1060, 0.0
    %v1084 = vmax.f32 %v1063, 0.0
    %v1085 = vmax.f32 %v1065, 0.0
    %v1086 = vmax.f32 %v1068, 0.0
    %v1087 = vmax.f32 %v1070, 0.0
    %v1088 = vld [vmem:[%s10] sm:$0xf]
    %v1089 = vpack.c.bf16 %v1073, %v1072
    %v1090 = vpack.c.bf16 %v1075, %v1074
    %v1091 = vpack.c.bf16 %v1077, %v1076
    %v1092 = vpack.c.bf16 %v1079, %v1078
    %v1093 = vpack.c.bf16 %v1081, %v1080
    %v1094 = vpack.c.bf16 %v1083, %v1082
    %v1095 = vpack.c.bf16 %v1085, %v1084
    %v1096 = vpack.c.bf16 %v1087, %v1086
    %1097 = vmatpush.bf16.xpose.msra.mxu0 %v1096
    %1098 = vmatpush.bf16.xpose.msra.mxu0 %v1095
    %1099 = vmatpush.bf16.xpose.msra.mxu0 %v1094
    %1100 = vmatpush.bf16.xpose.msra.mxu0 %v1093
    %1101 = vmatpush.bf16.xpose.msra.mxu0 %v1092
    %1102 = vmatpush.bf16.xpose.msra.mxu0 %v1091
    %1103 = vmatpush.bf16.xpose.msra.mxu0 %v1090
    %1104 = vmatpush.bf16.xpose.msra.mxu0 %v1089
    %1105 = vmatmul.bf16.gmra.mxu0 %v1088
    %v1106 = vpop.f32.mrf.mxu0
    %v1107 = vadd.f32 0.0, %v1106
    %v1108 = vpop.f32.mrf.mxu0
    %1109 = vdwg.mxu0
    %v1110 = vld [vmem:[#allocation2] sm:$0x1]
    %1112 = vset.pattern.permute.xlu0 0
    %1113 = vperm.xlu0 %1112, %v1110
    %v1114 = vpop.permute.xlu0 %1113
    %v1116 = vperm.slane %v1114, 0
    %v1117 = vadd.f32 %v1107, %v1116
    %1118 = vst [vmem:[%s12] sm:$0x1] %v1117
    // Predicated region
    $region74: #{critic_forward.1} parent=1 // pred_check
      _
    $region75: #{critic_forward.1} parent=1 // pred_check_branch
      %1120 = sbr.rel (0) target = $region77
    $region76: #{critic_forward.1} parent=1 // pred_region
      _
    $region77: #{critic_forward.1} parent=1 // pred_fallthru
      _
    // Predicated region
    $region78: #{critic_forward.1} parent=1 // pred_check
      _
    $region79: #{critic_forward.1} parent=1 // pred_check_branch
      %1122 = sbr.rel (0) target = $region81
    $region80: #{critic_forward.1} parent=1 // pred_region
      _
    $region81: #{critic_forward.1} parent=1 // pred_fallthru
      _
    %1123 = vsyncpa [#allocation4], 1
    %1124 = vsyncpa [#allocation6], 1
    %1125 = vsyncpa [#allocation9], 1
    %1126 = vsyncpa [#allocation12], 1

</llo_original>
